<compile_context>
chip_gen: v7x
topology: tpu7x:2x2x1
jax: 0.10.0
libtpu: 0.0.40
codegen_flags: <defaults>
</compile_context>

<pallas_src>
import math

import jax
import jax.numpy as jnp
from jax.experimental import pallas as pl
from jax.experimental.pallas import tpu as pltpu


def _round_up(x: int, m: int) -> int:
    return ((x + m - 1) // m) * m


# ----------------------------------------------------------------------------
# Kernels
# ----------------------------------------------------------------------------
def _log_softmax_f32(logits):
    m = jnp.max(logits, axis=-1, keepdims=True)
    shifted = logits - m
    lse = jnp.log(jnp.sum(jnp.exp(shifted), axis=-1, keepdims=True))
    return shifted - lse


def _gen_kernel_single(x_ref, w_ref, b_ref, o_ref):
    # Whole reduction in one step: no scratch, no init/finalize phases.
    logits = jnp.dot(x_ref[...], w_ref[...],
                     preferred_element_type=jnp.float32) + b_ref[...]
    o_ref[...] = _log_softmax_f32(logits).astype(o_ref.dtype)


def _gen_kernel_multi_f32(x_ref, w_ref, b_ref, o_ref):
    # Output dtype is f32: accumulate partial logits directly into the resident
    # output tile (its block index is constant across k) -> no VMEM scratch.
    k = pl.program_id(1)
    part = jnp.dot(x_ref[...], w_ref[...], preferred_element_type=jnp.float32)

    @pl.when(k == 0)
    def _():
        o_ref[...] = part          # init by assignment (no zero-then-add pass)

    @pl.when(k != 0)
    def _():
        o_ref[...] += part

    @pl.when(k == pl.num_programs(1) - 1)
    def _():
        o_ref[...] = _log_softmax_f32(o_ref[...] + b_ref[...])


def _gen_kernel_multi_acc(x_ref, w_ref, b_ref, o_ref, acc_ref):
    # Non-f32 output dtype: keep an f32 accumulator in VMEM scratch.
    k = pl.program_id(1)
    part = jnp.dot(x_ref[...], w_ref[...], preferred_element_type=jnp.float32)

    @pl.when(k == 0)
    def _():
        acc_ref[...] = part

    @pl.when(k != 0)
    def _():
        acc_ref[...] += part

    @pl.when(k == pl.num_programs(1) - 1)
    def _():
        o_ref[...] = _log_softmax_f32(acc_ref[...] + b_ref[...]).astype(o_ref.dtype)


# ----------------------------------------------------------------------------
# Wrapper
# ----------------------------------------------------------------------------
def make_generator(weight, bias, *, compute_dtype=jnp.bfloat16,
                   out_dtype=jnp.float32, vmem_budget_frac=0.75):
    """Build a Generator.forward callable with the weight prepared once.

    weight: (vocab, d_model)  [PyTorch nn.Linear layout]
    bias:   (vocab,)
    Returns f(x: (..., d_model)) -> log_softmax(x @ weight.T + bias, -1).
    """
    weight = jnp.asarray(weight)
    bias = jnp.asarray(bias)
    vocab, d_model = weight.shape

    K_pad = _round_up(d_model, 128)
    N_pad = _round_up(vocab, 128)
    comp_it = jnp.dtype(compute_dtype).itemsize
    out_it = jnp.dtype(out_dtype).itemsize
    sub = {4: 8, 2: 16, 1: 32}.get(comp_it, 8)   # sublane packing multiple
    out_is_f32 = jnp.dtype(out_dtype) == jnp.dtype(jnp.float32)

    # --- hoisted once: W^T pad + cast; bias pad (f32, -1e30 on pad columns) ---
    wt = jnp.zeros((K_pad, N_pad), compute_dtype).at[:d_model, :vocab].set(
        weight.T.astype(compute_dtype))
    b2 = jnp.full((1, N_pad), -1e30, jnp.float32).at[0, :vocab].set(
        bias.astype(jnp.float32))

    # --- VMEM budget from the actual chip (fallback: 64 MiB = v7x per-TC) ----
    try:
        vmem_cap = int(getattr(pltpu.get_tpu_info(), "vmem_capacity_bytes",
                               64 << 20))
    except Exception:
        vmem_cap = 64 << 20
    budget = int(vmem_budget_frac * vmem_cap)

    def _select_tiles(M):
        # K tile: single reduction step whenever d_model (padded) <= 1024.
        if K_pad <= 1024:
            tk = K_pad
        elif K_pad % 512 == 0:
            tk = 512
        elif K_pad % 256 == 0:
            tk = 256
        else:
            tk = 128
        # M tile: dtype-aware rounding; >=2 M tiles once M >= 256 so the v7x
        # megacore gets both TensorCores busy on the "parallel" axis.
        if M <= 128:
            tm = max(sub, _round_up(M, sub))
        elif M < 512:
            tm = 128
        else:
            tm = 256

        def footprint(tm_, tk_):
            f = 2 * tm_ * tk_ * comp_it            # x tiles (double-buffered)
            f += 2 * tk_ * N_pad * comp_it         # weight tiles
            f += 2 * 8 * N_pad * 4                 # bias row (sublane-padded)
            f += 2 * tm_ * N_pad * out_it          # output tiles
            if (K_pad // tk_) > 1 and not out_is_f32:
                f += tm_ * N_pad * 4               # f32 scratch accumulator
            return f

        # Shrink K tile, then M tile, until the footprint fits the budget.
        while footprint(tm, tk) > budget and tk > 128:
            nk = tk - 128
            while nk > 128 and K_pad % nk != 0:
                nk -= 128
            tk = nk
        while footprint(tm, tk) > budget and tm > sub:
            tm = max(sub, _round_up(tm // 2, sub))
        return tm, tk, footprint(tm, tk)

    @jax.jit
    def _fwd(x, wt_, b2_):
        *lead, dm = x.shape
        assert dm == d_model, "x last dim must equal d_model"
        M = int(math.prod(lead)) if lead else 1
        tm, tk, fp = _select_tiles(M)
        M_pad = _round_up(M, tm)
        n_m, n_k = M_pad // tm, K_pad // tk

        # Only x is padded / cast per call (weight was prepared at build time).
        x2 = x.reshape(M, d_model).astype(compute_dtype)
        if (M_pad, K_pad) != (M, d_model):
            x2 = jnp.zeros((M_pad, K_pad), compute_dtype).at[:M, :d_model].set(x2)

        vmem_limit = int(min(max(int(1.25 * fp) + (2 << 20), 16 << 20),
                             int(0.85 * vmem_cap)))

        cost = pl.CostEstimate(
            flops=2 * M_pad * K_pad * N_pad + 5 * M_pad * N_pad,
            transcendentals=M_pad * N_pad,
            bytes_accessed=(M_pad * K_pad * comp_it            # x
                            + n_m * K_pad * N_pad * comp_it    # W^T per M tile
                            + n_m * N_pad * 4                  # bias
                            + M_pad * N_pad * out_it),         # output
        )

        if n_k == 1:
            grid = (n_m,)
            kernel = _gen_kernel_single
            in_specs = [
                pl.BlockSpec((tm, K_pad), lambda i: (i, 0)),
                pl.BlockSpec((K_pad, N_pad), lambda i: (0, 0)),
                pl.BlockSpec((1, N_pad), lambda i: (0, 0)),
            ]
            out_specs = pl.BlockSpec((tm, N_pad), lambda i: (i, 0))
            scratch = []
            dims = ("parallel",)
        else:
            grid = (n_m, n_k)
            in_specs = [
                pl.BlockSpec((tm, tk), lambda i, k: (i, k)),
                pl.BlockSpec((tk, N_pad), lambda i, k: (k, 0)),
                pl.BlockSpec((1, N_pad), lambda i, k: (0, 0)),
            ]
            out_specs = pl.BlockSpec((tm, N_pad), lambda i, k: (i, 0))
            dims = ("parallel", "arbitrary")
            if out_is_f32:
                kernel = _gen_kernel_multi_f32
                scratch = []
            else:
                kernel = _gen_kernel_multi_acc
                scratch = [pltpu.VMEM((tm, N_pad), jnp.float32)]

        out_pad = pl.pallas_call(
            kernel,
            out_shape=jax.ShapeDtypeStruct((M_pad, N_pad), out_dtype),
            grid_spec=pltpu.PrefetchScalarGridSpec(
                num_scalar_prefetch=0,
                grid=grid,
                in_specs=in_specs,
                out_specs=out_specs,
                scratch_shapes=scratch,
            ),
            compiler_params=pltpu.CompilerParams(
                dimension_semantics=dims,
                vmem_limit_bytes=vmem_limit,
            ),
            cost_estimate=cost,
        )(x2, wt_, b2_)

        return out_pad[:M, :vocab].reshape(*lead, vocab)

    return lambda x: _fwd(x, wt, b2)


def generator_forward(x, weight, bias, **kwargs):
    """One-shot convenience wrapper (production code should cache make_generator)."""
    return make_generator(weight, bias, **kwargs)(x)


# ----------------------------------------------------------------------------
# Self-test
# ----------------------------------------------------------------------------
if __name__ == "__main__":
    key = jax.random.PRNGKey(0)

    # ---- main test: small shapes consistent with the module -----------------
    B, T, D, V = 2, 8, 32, 512
    kx, kw, kb, k1, k2, k3 = jax.random.split(key, 6)
    x = jax.random.normal(kx, (B, T, D), dtype=jnp.float32)
    weight = jax.random.normal(kw, (V, D), dtype=jnp.float32) * 0.05
    bias = jax.random.normal(kb, (V,), dtype=jnp.float32) * 0.05

    ref_f32 = jax.nn.log_softmax(jnp.einsum("btd,vd->btv", x, weight) + bias, -1)
    ref_bf16 = jax.nn.log_softmax(
        jnp.einsum("btd,vd->btv", x.astype(jnp.bfloat16),
                   weight.astype(jnp.bfloat16),
                   preferred_element_type=jnp.float32) + bias, -1)

    # 1) default path: bf16 MXU operands, f32 accumulate + epilogue, f32 out.
    gen = make_generator(weight, bias)
    out = jax.block_until_ready(gen(x))
    assert out.shape == (B, T, V)
    assert bool(jnp.allclose(out, ref_bf16, atol=5e-4, rtol=5e-4))
    assert bool(jnp.allclose(out, ref_f32, atol=5e-2, rtol=5e-2))

    # 2) full-f32 compute path (exact check against the f32 reference).
    gen_f32 = make_generator(weight, bias, compute_dtype=jnp.float32)
    out_f32 = jax.block_until_ready(gen_f32(x))
    assert bool(jnp.allclose(out_f32, ref_f32, atol=1e-5, rtol=1e-5))

    # 3) multi-K-step path (d_model > 1024 -> tiled reduction, accumulate into
    #    the resident f32 output) with a vocab that is not a multiple of 128.
    D2, V2 = 1280, 500
    x3 = jax.random.normal(k1, (2, 8, D2), dtype=jnp.float32)
    w3 = jax.random.normal(k2, (V2, D2), dtype=jnp.float32) * 0.02
    b3 = jax.random.normal(k3, (V2,), dtype=jnp.float32) * 0.02
    gen3 = make_generator(w3, b3)
    out3 = jax.block_until_ready(gen3(x3))
    ref3 = jax.nn.log_softmax(
        jnp.einsum("btd,vd->btv", x3.astype(jnp.bfloat16),
                   w3.astype(jnp.bfloat16),
                   preferred_element_type=jnp.float32) + b3, -1)
    assert out3.shape == (2, 8, V2)
    assert bool(jnp.allclose(out3, ref3, atol=2e-3, rtol=2e-3))

    print("KERNEL_OK")
</pallas_src>

<mosaic_0001>
module attributes {stable_mosaic.version = 11 : i64} {
  func.func @_gen_kernel_single(%arg0: i32, %arg1: memref<16x128xbf16, #tpu.memory_space<vmem>>, %arg2: memref<128x512xbf16, #tpu.memory_space<vmem>>, %arg3: memref<1x512xf32, #tpu.memory_space<vmem>>, %arg4: memref<16x512xf32, #tpu.memory_space<vmem>>) attributes {dimension_semantics = [#tpu.dimension_semantics<parallel>], iteration_bounds = array<i64: 1>, scalar_prefetch = 0 : i64, scratch_operands = 0 : i64, tpu.core_type = #tpu.core_type<tc>, window_params = [{transform_indices = @transform_0, window_bounds = array<i64: 16, 128>}, {pipeline_mode = #tpu.pipeline_mode<synchronous>, transform_indices = @transform_1, window_bounds = array<i64: 128, 512>}, {pipeline_mode = #tpu.pipeline_mode<synchronous>, transform_indices = @transform_2, window_bounds = array<i64: 1, 512>}, {transform_indices = @transform_3, window_bounds = array<i64: 16, 512>}]} {
    %c0 = arith.constant 0 : index
    %c0_0 = arith.constant 0 : index
    %0 = vector.load %arg1[%c0, %c0_0] : memref<16x128xbf16, #tpu.memory_space<vmem>>, vector<16x128xbf16>
    %c0_1 = arith.constant 0 : index
    %c0_2 = arith.constant 0 : index
    %1 = vector.load %arg2[%c0_1, %c0_2] : memref<128x512xbf16, #tpu.memory_space<vmem>>, vector<128x512xbf16>
    %cst = arith.constant dense<0.000000e+00> : vector<16x512xf32>
    %2 = tpu.matmul %0, %1, %cst {dimension_numbers = #tpu.dot_dimension_numbers<[1], [0], [0], [1], [0, 0, 1, 1], [], []>} : vector<16x128xbf16>, vector<128x512xbf16>, vector<16x512xf32> -> vector<16x512xf32>
    %c0_3 = arith.constant 0 : index
    %c0_4 = arith.constant 0 : index
    %3 = vector.load %arg3[%c0_3, %c0_4] : memref<1x512xf32, #tpu.memory_space<vmem>>, vector<1x512xf32>
    %4 = vector.broadcast %3 : vector<1x512xf32> to vector<16x512xf32>
    %5 = arith.addf %2, %4 : vector<16x512xf32>
    %cst_5 = arith.constant dense<0xFF800000> : vector<16xf32>
    %6 = vector.multi_reduction <maximumf>, %5, %cst_5 [1] : vector<16x512xf32> to vector<16xf32>
    %7 = vector.shape_cast %6 : vector<16xf32> to vector<16x1xf32>
    %8 = vector.broadcast %7 : vector<16x1xf32> to vector<16x512xf32>
    %9 = arith.subf %5, %8 : vector<16x512xf32>
    %10 = math.exp %9 : vector<16x512xf32>
    %cst_6 = arith.constant dense<0.000000e+00> : vector<16xf32>
    %11 = vector.multi_reduction <add>, %10, %cst_6 [1] : vector<16x512xf32> to vector<16xf32>
    %12 = vector.shape_cast %11 : vector<16xf32> to vector<16x1xf32>
    %13 = math.log %12 : vector<16x1xf32>
    %14 = vector.broadcast %13 : vector<16x1xf32> to vector<16x512xf32>
    %15 = arith.subf %9, %14 : vector<16x512xf32>
    %c0_7 = arith.constant 0 : index
    %c0_8 = arith.constant 0 : index
    %16 = vector.load %arg4[%c0_7, %c0_8] : memref<16x512xf32, #tpu.memory_space<vmem>>, vector<16x512xf32>
    tpu.vector_store %arg4[%c0_7, %c0_8], %15 {strides = array<i32>} : memref<16x512xf32, #tpu.memory_space<vmem>>, vector<16x512xf32>,
    return
  }
  func.func @transform_0(%arg0: i32) -> (i32, i32) {
    %c0_i32 = arith.constant 0 : i32
    %c0_i32_0 = arith.constant 0 : i32
    return %arg0, %c0_i32 : i32, i32
  }
  func.func @transform_1(%arg0: i32) -> (i32, i32) {
    %c0_i32 = arith.constant 0 : i32
    %c0_i32_0 = arith.constant 0 : i32
    %c0_i32_1 = arith.constant 0 : i32
    return %c0_i32, %c0_i32_0 : i32, i32
  }
  func.func @transform_2(%arg0: i32) -> (i32, i32) {
    %c0_i32 = arith.constant 0 : i32
    %c0_i32_0 = arith.constant 0 : i32
    %c0_i32_1 = arith.constant 0 : i32
    return %c0_i32, %c0_i32_0 : i32, i32
  }
  func.func @transform_3(%arg0: i32) -> (i32, i32) {
    %c0_i32 = arith.constant 0 : i32
    %c0_i32_0 = arith.constant 0 : i32
    return %arg0, %c0_i32 : i32, i32
  }
}

</mosaic_0001>

<llo_original>
// kernel: _fwd.1
$region0: #{_fwd.1}
  #allocation0 [shape = 'u32[]', space=smem, size = 0x4, offset = 0x4, fixed_abs, tag = 'smem constant byte address 0x4 - core index']
  #allocation1 [shape = 'u32[144,128]{1,0:T(1,128)}', space=vmem, size = 0x12000, scoped, tag = 'internal scratch']
  %s0 = inlined_call_operand.vmem [shape: bf16[16,128], index: 0, kind: input, shape index: {}]
  %s1 = inlined_call_operand.hbm [shape: bf16[128,512], index: 1, kind: input, shape index: {}]
  %s2 = inlined_call_operand.vmem [shape: f32[1,512], index: 2, kind: input, shape index: {}]
  %s3 = inlined_call_operand.hbm [shape: f32[16,512], index: 3, kind: output, shape index: {}]
  %s4 = sld [smem:[#allocation0]]
  $region26: #{_fwd.1} parent=0
    _
  %s6 = ssub.s32 1, %s4
  %s7 = scalar_select 0, %s6, %s4
  $region1: #{_fwd.1} parent=0
    #allocation2 [shape = 'u8[131072]{0}', space=vmem, size = 0x20000, scoped, tag = 'input window, operand 1, single buffered']
    #allocation3 [shape = 's32[1]{0}', space=sflag, size = 0x4, scoped, tag = 'scoped memory for _fwd.1']
    #allocation4 [shape = 's32[1]{0}', space=sflag, size = 0x4, scoped, tag = 'scoped memory for _fwd.1']
    #allocation5 [shape = 'u8[32768]{0}', space=vmem, size = 0x8000, scoped, tag = 'output window, operand 0, single buffered']
    %8 = vsyncpa [#allocation3], 0
    %9 = vsyncpa [#allocation4], 0
    // Predicated region
    $region2: #{_fwd.1} parent=1 // pred_check
      _
    $region3: #{_fwd.1} parent=1 // pred_check_branch
      %11 = sbr.rel (0) target = $region5
    $region4: #{_fwd.1} parent=1 // pred_region
      _
    $region5: #{_fwd.1} parent=1 // pred_fallthru
      _
    // Predicated region
    $region6: #{_fwd.1} parent=1 // pred_check
      _
    $region7: #{_fwd.1} parent=1 // pred_check_branch
      %13 = sbr.rel (0) target = $region9
    $region8: #{_fwd.1} parent=1 // pred_region
      %s15 = ssub.s32 4096, 4096
      %16 = vsyncadd [#allocation3], %s15
      %s17 = sshll.u32 [#allocation2], 4
      %s18 = int_to_ptr.vmem [resolvable:$true] %s17
      %23 = dma.hbm_to_vmem [thread:$0]  %s1, 4096, %s18, [#allocation3], 256, 256, 16
    $region9: #{_fwd.1} parent=1 // pred_fallthru
      _
    // Predicated region
    $region10: #{_fwd.1} parent=1 // pred_check
      _
    $region11: #{_fwd.1} parent=1 // pred_check_branch
      %25 = sbr.rel (0) target = $region13
    $region12: #{_fwd.1} parent=1 // pred_region
      _
    $region13: #{_fwd.1} parent=1 // pred_fallthru
      _
    // Predicated region
    $region14: #{_fwd.1} parent=1 // pred_check
      _
    $region15: #{_fwd.1} parent=1 // pred_check_branch
      %27 = sbr.rel (0) target = $region17
    $region16: #{_fwd.1} parent=1 // pred_region
      %28 = dma.done [#allocation3], 4096
    $region17: #{_fwd.1} parent=1 // pred_fallthru
      _
    %v30 = vld [vmem:[%s0] sm:$0xf]
    %v31 = vld [vmem:[%s0 + $0x4] sm:$0xf]
    %v32 = vld [vmem:[#allocation2] sm:$0xff]
    %v33 = vld [vmem:[#allocation2 + $0x8] sm:$0xff]
    %v34 = vld [vmem:[#allocation2 + $0x10] sm:$0xff]
    %v35 = vld [vmem:[#allocation2 + $0x18] sm:$0xff]
    %v36 = vld [vmem:[#allocation2 + $0x20] sm:$0xff]
    %v37 = vld [vmem:[#allocation2 + $0x28] sm:$0xff]
    %v38 = vld [vmem:[#allocation2 + $0x30] sm:$0xff]
    %v39 = vld [vmem:[#allocation2 + $0x38] sm:$0xff]
    %v40 = vld [vmem:[#allocation2 + $0x40] sm:$0xff]
    %v41 = vld [vmem:[#allocation2 + $0x48] sm:$0xff]
    %v42 = vld [vmem:[#allocation2 + $0x50] sm:$0xff]
    %v43 = vld [vmem:[#allocation2 + $0x58] sm:$0xff]
    %v44 = vld [vmem:[#allocation2 + $0x60] sm:$0xff]
    %v45 = vld [vmem:[#allocation2 + $0x68] sm:$0xff]
    %v46 = vld [vmem:[#allocation2 + $0x70] sm:$0xff]
    %v47 = vld [vmem:[#allocation2 + $0x78] sm:$0xff]
    %v48 = vld [vmem:[#allocation2 + $0x80] sm:$0xff]
    %v49 = vld [vmem:[#allocation2 + $0x88] sm:$0xff]
    %v50 = vld [vmem:[#allocation2 + $0x90] sm:$0xff]
    %v51 = vld [vmem:[#allocation2 + $0x98] sm:$0xff]
    %v52 = vld [vmem:[#allocation2 + $0xa0] sm:$0xff]
    %v53 = vld [vmem:[#allocation2 + $0xa8] sm:$0xff]
    %v54 = vld [vmem:[#allocation2 + $0xb0] sm:$0xff]
    %v55 = vld [vmem:[#allocation2 + $0xb8] sm:$0xff]
    %v56 = vld [vmem:[#allocation2 + $0xc0] sm:$0xff]
    %v57 = vld [vmem:[#allocation2 + $0xc8] sm:$0xff]
    %v58 = vld [vmem:[#allocation2 + $0xd0] sm:$0xff]
    %v59 = vld [vmem:[#allocation2 + $0xd8] sm:$0xff]
    %v60 = vld [vmem:[#allocation2 + $0xe0] sm:$0xff]
    %v61 = vld [vmem:[#allocation2 + $0xe8] sm:$0xff]
    %v62 = vld [vmem:[#allocation2 + $0xf0] sm:$0xff]
    %v63 = vld [vmem:[#allocation2 + $0xf8] sm:$0xff]
    %v64 = vld [vmem:[%s2] sm:$0xf]
    %v66 = vlaneseq
    %v67 = vshrl.u32 %v66, 7
    %v68 = vsub.s32 0, %v67
    %v69 = vrot.slane %v64, %v68
    %v70 = vlaneseq
    %v71 = vshrl.u32 %v70, 7
    %v72 = vsub.s32 1, %v71
    %v73 = vrot.slane %v64, %v72
    %v74 = vlaneseq
    %v75 = vshrl.u32 %v74, 7
    %v76 = vsub.s32 2, %v75
    %v77 = vrot.slane %v64, %v76
    %v78 = vlaneseq
    %v79 = vshrl.u32 %v78, 7
    %v80 = vsub.s32 3, %v79
    %v81 = vrot.slane %v64, %v80
    %v88 = vunpack.c.l.b16 %v30
    %v89 = vunpack.c.l.b16 %v31
    %v90 = vpack.c.b16 %v89, %v88
    %v124 = vunpack.c.l.b16 %v32
    %v125 = vunpack.c.h.b16 %v32
    %v126 = vunpack.c.l.b16 %v33
    %v127 = vunpack.c.h.b16 %v33
    %v128 = vunpack.c.l.b16 %v34
    %v129 = vunpack.c.h.b16 %v34
    %v130 = vunpack.c.l.b16 %v35
    %v131 = vunpack.c.h.b16 %v35
    %v132 = vunpack.c.l.b16 %v36
    %v133 = vunpack.c.h.b16 %v36
    %v134 = vunpack.c.l.b16 %v37
    %v135 = vunpack.c.h.b16 %v37
    %v136 = vunpack.c.l.b16 %v38
    %v137 = vunpack.c.h.b16 %v38
    %v138 = vunpack.c.l.b16 %v39
    %v139 = vunpack.c.h.b16 %v39
    %v140 = vunpack.c.l.b16 %v40
    %v141 = vunpack.c.h.b16 %v40
    %v142 = vunpack.c.l.b16 %v41
    %v143 = vunpack.c.h.b16 %v41
    %v144 = vunpack.c.l.b16 %v42
    %v145 = vunpack.c.h.b16 %v42
    %v146 = vunpack.c.l.b16 %v43
    %v147 = vunpack.c.h.b16 %v43
    %v148 = vunpack.c.l.b16 %v44
    %v149 = vunpack.c.h.b16 %v44
    %v150 = vunpack.c.l.b16 %v45
    %v151 = vunpack.c.h.b16 %v45
    %v152 = vunpack.c.l.b16 %v46
    %v153 = vunpack.c.h.b16 %v46
    %v154 = vunpack.c.l.b16 %v47
    %v155 = vunpack.c.h.b16 %v47
    %v156 = vunpack.c.l.b16 %v48
    %v157 = vunpack.c.h.b16 %v48
    %v158 = vunpack.c.l.b16 %v49
    %v159 = vunpack.c.h.b16 %v49
    %v160 = vunpack.c.l.b16 %v50
    %v161 = vunpack.c.h.b16 %v50
    %v162 = vunpack.c.l.b16 %v51
    %v163 = vunpack.c.h.b16 %v51
    %v164 = vunpack.c.l.b16 %v52
    %v165 = vunpack.c.h.b16 %v52
    %v166 = vunpack.c.l.b16 %v53
    %v167 = vunpack.c.h.b16 %v53
    %v168 = vunpack.c.l.b16 %v54
    %v169 = vunpack.c.h.b16 %v54
    %v170 = vunpack.c.l.b16 %v55
    %v171 = vunpack.c.h.b16 %v55
    %v172 = vunpack.c.l.b16 %v56
    %v173 = vunpack.c.h.b16 %v56
    %v174 = vunpack.c.l.b16 %v57
    %v175 = vunpack.c.h.b16 %v57
    %v176 = vunpack.c.l.b16 %v58
    %v177 = vunpack.c.h.b16 %v58
    %v178 = vunpack.c.l.b16 %v59
    %v179 = vunpack.c.h.b16 %v59
    %v180 = vunpack.c.l.b16 %v60
    %v181 = vunpack.c.h.b16 %v60
    %v182 = vunpack.c.l.b16 %v61
    %v183 = vunpack.c.h.b16 %v61
    %v184 = vunpack.c.l.b16 %v62
    %v185 = vunpack.c.h.b16 %v62
    %v186 = vunpack.c.l.b16 %v63
    %v187 = vunpack.c.h.b16 %v63
    %v188 = vpack.c.b16 %v128, %v124
    %v189 = vpack.c.b16 %v129, %v125
    %v190 = vpack.c.b16 %v130, %v126
    %v191 = vpack.c.b16 %v131, %v127
    %v192 = vpack.c.b16 %v136, %v132
    %v193 = vpack.c.b16 %v137, %v133
    %v194 = vpack.c.b16 %v138, %v134
    %v195 = vpack.c.b16 %v139, %v135
    %v196 = vpack.c.b16 %v144, %v140
    %v197 = vpack.c.b16 %v145, %v141
    %v198 = vpack.c.b16 %v146, %v142
    %v199 = vpack.c.b16 %v147, %v143
    %v200 = vpack.c.b16 %v152, %v148
    %v201 = vpack.c.b16 %v153, %v149
    %v202 = vpack.c.b16 %v154, %v150
    %v203 = vpack.c.b16 %v155, %v151
    %v204 = vpack.c.b16 %v160, %v156
    %v205 = vpack.c.b16 %v161, %v157
    %v206 = vpack.c.b16 %v162, %v158
    %v207 = vpack.c.b16 %v163, %v159
    %v208 = vpack.c.b16 %v168, %v164
    %v209 = vpack.c.b16 %v169, %v165
    %v210 = vpack.c.b16 %v170, %v166
    %v211 = vpack.c.b16 %v171, %v167
    %v212 = vpack.c.b16 %v176, %v172
    %v213 = vpack.c.b16 %v177, %v173
    %v214 = vpack.c.b16 %v178, %v174
    %v215 = vpack.c.b16 %v179, %v175
    %v216 = vpack.c.b16 %v184, %v180
    %v217 = vpack.c.b16 %v185, %v181
    %v218 = vpack.c.b16 %v186, %v182
    %v219 = vpack.c.b16 %v187, %v183
    %252 = vmatprep.subr.bf16.mxu0 %v189
    %253 = vmatpush1.bf16.msra.mxu0 %v188
    %254 = vmatprep.subr.bf16.mxu0 %v193
    %255 = vmatpush1.bf16.msra.mxu0 %v192
    %256 = vmatprep.subr.bf16.mxu0 %v197
    %257 = vmatpush1.bf16.msra.mxu0 %v196
    %258 = vmatprep.subr.bf16.mxu0 %v201
    %259 = vmatpush1.bf16.msra.mxu0 %v200
    %260 = vmatprep.subr.bf16.mxu0 %v205
    %261 = vmatpush1.bf16.msra.mxu0 %v204
    %262 = vmatprep.subr.bf16.mxu0 %v209
    %263 = vmatpush1.bf16.msra.mxu0 %v208
    %264 = vmatprep.subr.bf16.mxu0 %v213
    %265 = vmatpush1.bf16.msra.mxu0 %v212
    %266 = vmatprep.subr.bf16.mxu0 %v217
    %267 = vmatpush1.bf16.msra.mxu0 %v216
    %268 = vmatprep.subr.bf16.mxu0 0
    %269 = vmatpush1.bf16.msra.mxu0 0
    %270 = vmatprep.subr.bf16.mxu0 0
    %271 = vmatpush1.bf16.msra.mxu0 0
    %272 = vmatprep.subr.bf16.mxu0 0
    %273 = vmatpush1.bf16.msra.mxu0 0
    %274 = vmatprep.subr.bf16.mxu0 0
    %275 = vmatpush1.bf16.msra.mxu0 0
    %276 = vmatprep.subr.bf16.mxu0 0
    %277 = vmatpush1.bf16.msra.mxu0 0
    %278 = vmatprep.subr.bf16.mxu0 0
    %279 = vmatpush1.bf16.msra.mxu0 0
    %280 = vmatprep.subr.bf16.mxu0 0
    %281 = vmatpush1.bf16.msra.mxu0 0
    %282 = vmatprep.subr.bf16.mxu0 0
    %283 = vmatpush1.bf16.msra.mxu0 0
    %284 = vmatprep.mubr.bf16.mxu0 0
    %285 = vmatmul.mubr.bf16.gmra.mrb[0].mxu0 %v90
    %v286 = vpop.f32.mrb[0].mxu0
    %v287 = vadd.f32 %v69, %v286
    %v288 = vpop.f32.mrb[0].mxu0
    %v289 = vadd.f32 %v73, %v288
    %v290 = vpop.f32.mrb[0].mxu0
    %v291 = vadd.f32 %v69, %v290
    %v292 = vpop.f32.mrb[0].mxu0
    %v293 = vadd.f32 %v73, %v292
    %294 = vdwg.mxu0
    %295 = vmatprep.subr.bf16.mxu0 %v191
    %296 = vmatpush1.bf16.msra.mxu0 %v190
    %297 = vmatprep.subr.bf16.mxu0 %v195
    %298 = vmatpush1.bf16.msra.mxu0 %v194
    %299 = vmatprep.subr.bf16.mxu0 %v199
    %300 = vmatpush1.bf16.msra.mxu0 %v198
    %301 = vmatprep.subr.bf16.mxu0 %v203
    %302 = vmatpush1.bf16.msra.mxu0 %v202
    %303 = vmatprep.subr.bf16.mxu0 %v207
    %304 = vmatpush1.bf16.msra.mxu0 %v206
    %305 = vmatprep.subr.bf16.mxu0 %v211
    %306 = vmatpush1.bf16.msra.mxu0 %v210
    %307 = vmatprep.subr.bf16.mxu0 %v215
    %308 = vmatpush1.bf16.msra.mxu0 %v214
    %309 = vmatprep.subr.bf16.mxu0 %v219
    %310 = vmatpush1.bf16.msra.mxu0 %v218
    %311 = vmatprep.subr.bf16.mxu0 0
    %312 = vmatpush1.bf16.msra.mxu0 0
    %313 = vmatprep.subr.bf16.mxu0 0
    %314 = vmatpush1.bf16.msra.mxu0 0
    %315 = vmatprep.subr.bf16.mxu0 0
    %316 = vmatpush1.bf16.msra.mxu0 0
    %317 = vmatprep.subr.bf16.mxu0 0
    %318 = vmatpush1.bf16.msra.mxu0 0
    %319 = vmatprep.subr.bf16.mxu0 0
    %320 = vmatpush1.bf16.msra.mxu0 0
    %321 = vmatprep.subr.bf16.mxu0 0
    %322 = vmatpush1.bf16.msra.mxu0 0
    %323 = vmatprep.subr.bf16.mxu0 0
    %324 = vmatpush1.bf16.msra.mxu0 0
    %325 = vmatprep.subr.bf16.mxu0 0
    %326 = vmatpush1.bf16.msra.mxu0 0
    %327 = vmatprep.mubr.bf16.mxu0 0
    %328 = vmatmul.mubr.bf16.gmra.mrb[0].mxu0 %v90
    %v329 = vpop.f32.mrb[0].mxu0
    %v330 = vadd.f32 %v77, %v329
    %v331 = vpop.f32.mrb[0].mxu0
    %v332 = vadd.f32 %v81, %v331
    %v333 = vpop.f32.mrb[0].mxu0
    %v334 = vadd.f32 %v77, %v333
    %v335 = vpop.f32.mrb[0].mxu0
    %v336 = vadd.f32 %v81, %v335
    %337 = vdwg.mxu0
    %v338 = vmax.f32 %v287, %v330
    %v339 = vmax.f32 %v289, %v332
    %v340 = vmax.f32 %v338, %v339
    %341 = vmax.xlane.f32.xlu0 %v340
    %v342 = vpop.xlane.xlu0 %341
    %v343 = vmax.f32 %v291, %v334
    %v344 = vmax.f32 %v293, %v336
    %v345 = vmax.f32 %v343, %v344
    %346 = vmax.xlane.f32.xlu0 %v345
    %v347 = vpop.xlane.xlu0 %346
    %v348 = vsub.f32 %v287, %v342
    %v349 = vsub.f32 %v289, %v342
    %v350 = vsub.f32 %v330, %v342
    %v351 = vsub.f32 %v332, %v342
    %v352 = vsub.f32 %v291, %v347
    %v353 = vsub.f32 %v293, %v347
    %v354 = vsub.f32 %v334, %v347
    %v355 = vsub.f32 %v336, %v347
    %v356 = vmul.f32 %v348, 1.442695
    %v357 = vpow.pop %v356
    %v358 = vmul.f32 %v349, 1.442695
    %v359 = vpow.pop %v358
    %v360 = vmul.f32 %v350, 1.442695
    %v361 = vpow.pop %v360
    %v362 = vmul.f32 %v351, 1.442695
    %v363 = vpow.pop %v362
    %v364 = vmul.f32 %v352, 1.442695
    %v365 = vpow.pop %v364
    %v366 = vmul.f32 %v353, 1.442695
    %v367 = vpow.pop %v366
    %v368 = vmul.f32 %v354, 1.442695
    %v369 = vpow.pop %v368
    %v370 = vmul.f32 %v355, 1.442695
    %v371 = vpow.pop %v370
    %v372 = vadd.f32 %v357, %v359
    %v373 = vadd.f32 %v372, %v361
    %v374 = vadd.f32 %v373, %v363
    %375 = vadd.xlane.f32.xlu0 %v374
    %v376 = vpop.xlane.xlu0 %375
    %v377 = vadd.f32 %v365, %v367
    %v378 = vadd.f32 %v377, %v369
    %v379 = vadd.f32 %v378, %v371
    %380 = vadd.xlane.f32.xlu0 %v379
    %v381 = vpop.xlane.xlu0 %380
    %v382 = vlog2.pop %v376
    %v383 = vmul.f32 %v382, 0.6931472
    %v384 = vlog2.pop %v381
    %v385 = vmul.f32 %v384, 0.6931472
    %v386 = vsub.f32 %v348, %v383
    %v387 = vsub.f32 %v349, %v383
    %v388 = vsub.f32 %v350, %v383
    %v389 = vsub.f32 %v351, %v383
    %v390 = vsub.f32 %v352, %v385
    %v391 = vsub.f32 %v353, %v385
    %v392 = vsub.f32 %v354, %v385
    %v393 = vsub.f32 %v355, %v385
    %394 = vst [vmem:[#allocation5] sm:$0xff] %v386
    %395 = vst [vmem:[#allocation5 + $0x8] sm:$0xff] %v387
    %396 = vst [vmem:[#allocation5 + $0x10] sm:$0xff] %v388
    %397 = vst [vmem:[#allocation5 + $0x18] sm:$0xff] %v389
    %398 = vst [vmem:[#allocation5 + $0x20] sm:$0xff] %v390
    %399 = vst [vmem:[#allocation5 + $0x28] sm:$0xff] %v391
    %400 = vst [vmem:[#allocation5 + $0x30] sm:$0xff] %v392
    %401 = vst [vmem:[#allocation5 + $0x38] sm:$0xff] %v393
    // Predicated region
    $region18: #{_fwd.1} parent=1 // pred_check
      _
    $region19: #{_fwd.1} parent=1 // pred_check_branch
      %403 = sbr.rel (0) target = $region21
    $region20: #{_fwd.1} parent=1 // pred_region
      %s405 = ssub.s32 1024, 1024
      %406 = vsyncadd [#allocation4], %s405
      %s407 = sshll.u32 [#allocation5], 4
      %s408 = int_to_ptr.vmem [resolvable:$true] %s407
      %413 = dma.vmem_to_hbm [thread:$0]  %s408, 1024, %s3, [#allocation4], 512, 512, 32
    $region21: #{_fwd.1} parent=1 // pred_fallthru
      _
    // Predicated region
    $region22: #{_fwd.1} parent=1 // pred_check
      _
    $region23: #{_fwd.1} parent=1 // pred_check_branch
      %415 = sbr.rel (0) target = $region25
    $region24: #{_fwd.1} parent=1 // pred_region
      %416 = dma.done [#allocation4], 1024
    $region25: #{_fwd.1} parent=1 // pred_fallthru
      _
    %417 = vsyncpa [#allocation3], 1
    %418 = vsyncpa [#allocation4], 1

</llo_original>
